<compile_context>
chip_gen: v7x
topology: tpu7x:2x2x1
jax: 0.10.0
libtpu: 0.0.40
codegen_flags: <defaults>
</compile_context>

<pallas_src>
import functools

import jax
import jax.numpy as jnp
from jax import lax
from jax.experimental import pallas as pl
from jax.experimental.pallas import tpu as pltpu

NUM_CLASSES = 35
ALPHA = 1.0
GAMMA = 2.0  # applied as an explicit square in the kernel (gamma == 2)


def _round_up(x, m):
    return (x + m - 1) // m * m


def focal_loss_kernel(x_ref, t_ref, out_ref, *, total_n, tm, has_partial,
                      approx_recip):
    """One grid step processes a (TM, 35) row-major tile.

    x_ref   : (TM, 35)    f32  logits tile (rows on sublanes, classes on lanes).
    t_ref   : (TM, 1)     i32  class label per row.
    out_ref : (1, 1, 35)  f32  per-tile, per-class partial sums of the focal loss.
    """
    x = x_ref[...]                                        # (TM, 35) float32
    t = t_ref[...]                                        # (TM, 1)  int32

    col = lax.broadcasted_iota(jnp.int32, x.shape, 1)
    onehot = col == t                                     # eye(35)[t] as a bool mask

    # Numerically-stable weighted BCE-with-logits, weight (1 or 7) folded into
    # the select:
    #   base = max(x,0) + log1p(exp(-|x|))                (= bce for non-target)
    #   bce  = where(onehot, 7*(base - x), base)
    e = jnp.exp(-jnp.abs(x))                              # transcendental #1
    base = jnp.maximum(x, 0.0) + jnp.log1p(e)             # transcendental #2
    bce = jnp.where(onehot, 7.0 * (base - x), base)

    # pt = exp(-bce) without a third exp:
    #   exp(-base)        = 1 - sigmoid(x)
    #   exp(-7*(base-x))  = sigmoid(x)**7
    one_plus_e = 1.0 + e
    if approx_recip:
        r = pl.reciprocal(one_plus_e, approx=True)        # EUP vrcp, nearly free
    else:
        r = 1.0 / one_plus_e                              # exact path
    sig = jnp.where(x >= 0.0, r, e * r)                   # sigmoid(x)
    s2 = sig * sig
    s7 = s2 * s2 * s2 * sig                               # sigmoid(x)**7 (VPU muls)
    pt = jnp.where(onehot, s7, 1.0 - sig)                 # == exp(-bce)

    omp = 1.0 - pt
    f_loss = omp * omp * bce                              # gamma == 2 -> explicit square
    if ALPHA != 1.0:                                      # elided for ALPHA == 1
        f_loss = ALPHA * f_loss

    def store(vals):
        # Sublane-only reduce; the single cross-lane reduce happens outside.
        col_sums = jnp.sum(vals, axis=0, keepdims=True)   # (1, 35)
        out_ref[...] = col_sums.reshape(1, 1, NUM_CLASSES)

    if has_partial:
        step = pl.program_id(0)
        last = pl.num_programs(0) - 1

        @pl.when(step == last)
        def _masked():
            row = lax.broadcasted_iota(jnp.int32, x.shape, 0)
            valid = (step * tm + row) < total_n
            # Must be a select (not multiply-by-mask): the dead rows of the
            # partial block hold undefined data that may be NaN/Inf.
            store(jnp.where(valid, f_loss, 0.0))

        @pl.when(step != last)
        def _full():
            store(f_loss)
    else:
        store(f_loss)


def focal_loss(logits, targets, *, tile_m=8192, approx_reciprocal=True):
    """logits: [N, 35] float, targets: [N] int class ids -> scalar mean focal loss.

    Targets are assumed to be valid class ids in [0, 35) (as torch.eye(35)[t]
    requires in the reference module).
    """
    n, c = logits.shape
    assert c == NUM_CLASSES

    x = logits.astype(jnp.float32)                        # natural (N, 35) layout
    t2 = targets.reshape(-1).astype(jnp.int32).reshape(n, 1)

    tile_m = _round_up(tile_m, 8)
    if n <= tile_m:
        tm = n                                            # single full block (any N)
    else:
        tm = tile_m                                       # multiple of 8
    num_tiles = (n + tm - 1) // tm
    has_partial = (n % tm) != 0

    kernel = functools.partial(
        focal_loss_kernel, total_n=n, tm=tm, has_partial=has_partial,
        approx_recip=approx_reciprocal)

    partials = pl.pallas_call(
        kernel,
        out_shape=jax.ShapeDtypeStruct((num_tiles, 1, NUM_CLASSES), jnp.float32),
        grid_spec=pltpu.PrefetchScalarGridSpec(
            num_scalar_prefetch=0,
            grid=(num_tiles,),
            in_specs=[
                pl.BlockSpec((tm, NUM_CLASSES), lambda i: (i, 0)),
                pl.BlockSpec((tm, 1), lambda i: (i, 0)),
            ],
            out_specs=pl.BlockSpec((1, 1, NUM_CLASSES), lambda i: (i, 0, 0)),
        ),
        compiler_params=pltpu.CompilerParams(
            dimension_semantics=("parallel",),            # v7x: both TensorCores
            vmem_limit_bytes=32 * 1024 * 1024,            # ~2.3 MiB actually used
        ),
        cost_estimate=pl.CostEstimate(
            flops=22 * n * NUM_CLASSES,
            transcendentals=2 * n * NUM_CLASSES,
            bytes_accessed=4 * n * NUM_CLASSES + 4 * n + 4 * num_tiles * NUM_CLASSES,
        ),
    )(x, t2)

    # One tiny cross-tile / cross-class reduce + mean scaling outside the kernel.
    return jnp.sum(partials) * (1.0 / float(n * NUM_CLASSES))


def focal_loss_ref(logits, targets):
    """Pure-JAX reference mirroring the PyTorch module."""
    onehot = jax.nn.one_hot(targets.reshape(-1), NUM_CLASSES, dtype=jnp.float32)
    w = 1.0 + 6.0 * onehot
    x = logits.astype(jnp.float32)
    bce = w * (jnp.maximum(x, 0.0) - x * onehot + jnp.log1p(jnp.exp(-jnp.abs(x))))
    pt = jnp.exp(-bce)
    return jnp.mean(ALPHA * (1.0 - pt) ** GAMMA * bce)


if __name__ == "__main__":
    import numpy as np

    key = jax.random.PRNGKey(0)
    k_logits, k_targets, k_logits2, k_targets2 = jax.random.split(key, 4)

    # Small shapes consistent with the module: N rows x 35 topic logits.
    N = 8
    logits = jax.random.normal(k_logits, (N, NUM_CLASSES), dtype=jnp.float32) * 2.0
    targets = jax.random.randint(k_targets, (N,), 0, NUM_CLASSES, dtype=jnp.int32)

    ref = np.asarray(jax.block_until_ready(focal_loss_ref(logits, targets)))

    # Default fast path (approx EUP reciprocal inside the sigmoid rewrite).
    loss = np.asarray(jax.block_until_ready(focal_loss(logits, targets)))
    assert np.allclose(loss, ref, rtol=5e-3, atol=1e-5), (loss, ref)

    # Exact-reciprocal path matches the reference tightly.
    loss_exact = np.asarray(jax.block_until_ready(
        focal_loss(logits, targets, approx_reciprocal=False)))
    assert np.allclose(loss_exact, ref, rtol=1e-4, atol=1e-6), (loss_exact, ref)

    # Multi-tile path with a partial last block (exercises the mask + grid).
    N2 = 20
    logits2 = jax.random.normal(k_logits2, (N2, NUM_CLASSES), dtype=jnp.float32) * 2.0
    targets2 = jax.random.randint(k_targets2, (N2,), 0, NUM_CLASSES, dtype=jnp.int32)
    loss2 = np.asarray(jax.block_until_ready(focal_loss(logits2, targets2, tile_m=8)))
    ref2 = np.asarray(jax.block_until_ready(focal_loss_ref(logits2, targets2)))
    assert np.allclose(loss2, ref2, rtol=5e-3, atol=1e-5), (loss2, ref2)

    print("KERNEL_OK")
</pallas_src>

<mosaic_0001>
module attributes {stable_mosaic.version = 11 : i64} {
  func.func @focal_loss_kernel(%arg0: i32, %arg1: memref<8x35xf32, #tpu.memory_space<vmem>>, %arg2: memref<8x1xi32, #tpu.memory_space<vmem>>, %arg3: memref<1x1x35xf32, #tpu.memory_space<vmem>>) attributes {dimension_semantics = [#tpu.dimension_semantics<parallel>], iteration_bounds = array<i64: 1>, scalar_prefetch = 0 : i64, scratch_operands = 0 : i64, tpu.core_type = #tpu.core_type<tc>, window_params = [{transform_indices = @transform_0, window_bounds = array<i64: 8, 35>}, {transform_indices = @transform_1, window_bounds = array<i64: 8, 1>}, {transform_indices = @transform_2, window_bounds = array<i64: 1, 1, 35>}]} {
    %c0 = arith.constant 0 : index
    %c0_0 = arith.constant 0 : index
    %0 = vector.load %arg1[%c0, %c0_0] : memref<8x35xf32, #tpu.memory_space<vmem>>, vector<8x35xf32>
    %c0_1 = arith.constant 0 : index
    %c0_2 = arith.constant 0 : index
    %1 = vector.load %arg2[%c0_1, %c0_2] : memref<8x1xi32, #tpu.memory_space<vmem>>, vector<8x1xi32>
    %2 = tpu.iota {dimensions = array<i32: 1>} : vector<8x35xi32>
    %3 = vector.broadcast %1 : vector<8x1xi32> to vector<8x35xi32>
    %4 = arith.cmpi eq, %2, %3 : vector<8x35xi32>
    %5 = math.absf %0 : vector<8x35xf32>
    %cst = arith.constant 0.000000e+00 : f32
    %6 = vector.broadcast %cst : f32 to vector<8x35xf32>
    %7 = arith.subf %6, %5 : vector<8x35xf32>
    %8 = math.exp %7 : vector<8x35xf32>
    %cst_3 = arith.constant 0.000000e+00 : f32
    %9 = vector.broadcast %cst_3 : f32 to vector<8x35xf32>
    %10 = arith.maximumf %0, %9 : vector<8x35xf32>
    %11 = math.log1p %8 : vector<8x35xf32>
    %12 = arith.addf %10, %11 : vector<8x35xf32>
    %13 = arith.subf %12, %0 : vector<8x35xf32>
    %cst_4 = arith.constant 7.000000e+00 : f32
    %14 = vector.broadcast %cst_4 : f32 to vector<8x35xf32>
    %15 = arith.mulf %14, %13 : vector<8x35xf32>
    %16 = arith.select %4, %15, %12 : vector<8x35xi1>, vector<8x35xf32>
    %cst_5 = arith.constant 1.000000e+00 : f32
    %17 = vector.broadcast %cst_5 : f32 to vector<8x35xf32>
    %18 = arith.addf %17, %8 : vector<8x35xf32>
    %19 = tpu.reciprocal %18 {approx = true} : vector<8x35xf32> -> vector<8x35xf32>
    %cst_6 = arith.constant 0.000000e+00 : f32
    %20 = vector.broadcast %cst_6 : f32 to vector<8x35xf32>
    %21 = arith.cmpf oge, %0, %20 : vector<8x35xf32>
    %22 = arith.mulf %8, %19 : vector<8x35xf32>
    %23 = arith.select %21, %19, %22 : vector<8x35xi1>, vector<8x35xf32>
    %24 = arith.mulf %23, %23 : vector<8x35xf32>
    %25 = arith.mulf %24, %24 : vector<8x35xf32>
    %26 = arith.mulf %25, %24 : vector<8x35xf32>
    %27 = arith.mulf %26, %23 : vector<8x35xf32>
    %cst_7 = arith.constant 1.000000e+00 : f32
    %28 = vector.broadcast %cst_7 : f32 to vector<8x35xf32>
    %29 = arith.subf %28, %23 : vector<8x35xf32>
    %30 = arith.select %4, %27, %29 : vector<8x35xi1>, vector<8x35xf32>
    %cst_8 = arith.constant 1.000000e+00 : f32
    %31 = vector.broadcast %cst_8 : f32 to vector<8x35xf32>
    %32 = arith.subf %31, %30 : vector<8x35xf32>
    %33 = arith.mulf %32, %32 : vector<8x35xf32>
    %34 = arith.mulf %33, %16 : vector<8x35xf32>
    %cst_9 = arith.constant dense<0.000000e+00> : vector<35xf32>
    %35 = vector.multi_reduction <add>, %34, %cst_9 [0] : vector<8x35xf32> to vector<35xf32>
    %36 = vector.shape_cast %35 : vector<35xf32> to vector<1x35xf32>
    %37 = vector.shape_cast %36 : vector<1x35xf32> to vector<1x1x35xf32>
    %c0_10 = arith.constant 0 : index
    %c0_11 = arith.constant 0 : index
    %c0_12 = arith.constant 0 : index
    %38 = vector.load %arg3[%c0_10, %c0_11, %c0_12] : memref<1x1x35xf32, #tpu.memory_space<vmem>>, vector<1x1x35xf32>
    tpu.vector_store %arg3[%c0_10, %c0_11, %c0_12], %37 {strides = array<i32>} : memref<1x1x35xf32, #tpu.memory_space<vmem>>, vector<1x1x35xf32>,
    return
  }
  func.func @transform_0(%arg0: i32) -> (i32, i32) {
    %c0_i32 = arith.constant 0 : i32
    %c0_i32_0 = arith.constant 0 : i32
    return %arg0, %c0_i32 : i32, i32
  }
  func.func @transform_1(%arg0: i32) -> (i32, i32) {
    %c0_i32 = arith.constant 0 : i32
    %c0_i32_0 = arith.constant 0 : i32
    return %arg0, %c0_i32 : i32, i32
  }
  func.func @transform_2(%arg0: i32) -> (i32, i32, i32) {
    %c0_i32 = arith.constant 0 : i32
    %c0_i32_0 = arith.constant 0 : i32
    %c0_i32_1 = arith.constant 0 : i32
    return %arg0, %c0_i32, %c0_i32_0 : i32, i32, i32
  }
}

</mosaic_0001>

<llo_original>
// kernel: tpu_custom_call.1
$region0: #{tpu_custom_call.1}
  #allocation0 [shape = 'u32[]', space=smem, size = 0x4, offset = 0x4, fixed_abs, tag = 'smem constant byte address 0x4 - core index']
  #allocation1 [shape = 'u32[144,128]{1,0:T(1,128)}', space=vmem, size = 0x12000, scoped, tag = 'internal scratch']
  %s0 = inlined_call_operand.vmem [shape: f32[8,35], index: 0, kind: input, shape index: {}]
  %s1 = inlined_call_operand.vmem [shape: s32[8,1], index: 1, kind: input, shape index: {}]
  %s2 = inlined_call_operand.hbm [shape: f32[1,1,35], index: 2, kind: output, shape index: {}]
  %s3 = sld [smem:[#allocation0]]
  $region18: #{tpu_custom_call.1} parent=0
    _
  %s5 = ssub.s32 1, %s3
  %s6 = scalar_select 0, %s5, %s3
  $region1: #{tpu_custom_call.1} parent=0
    #allocation2 [shape = 'u8[512]{0}', space=vmem, size = 0x400, scoped, tag = 'output window, operand 0, single buffered']
    #allocation3 [shape = 's32[1]{0}', space=sflag, size = 0x4, scoped, tag = 'scoped memory for tpu_custom_call.1']
    %7 = vsyncpa [#allocation3], 0
    // Predicated region
    $region2: #{tpu_custom_call.1} parent=1 // pred_check
      _
    $region3: #{tpu_custom_call.1} parent=1 // pred_check_branch
      %9 = sbr.rel (0) target = $region5
    $region4: #{tpu_custom_call.1} parent=1 // pred_region
      _
    $region5: #{tpu_custom_call.1} parent=1 // pred_fallthru
      _
    // Predicated region
    $region6: #{tpu_custom_call.1} parent=1 // pred_check
      _
    $region7: #{tpu_custom_call.1} parent=1 // pred_check_branch
      %11 = sbr.rel (0) target = $region9
    $region8: #{tpu_custom_call.1} parent=1 // pred_region
      _
    $region9: #{tpu_custom_call.1} parent=1 // pred_fallthru
      _
    %v12 = vld [vmem:[%s0] sm:$0xff]
    %v13 = vld [vmem:[%s1] sm:$0xff]
    %v14 = vlaneseq
    %v15 = vand.u32 %v14, 127
    %16 = vset.pattern.permute.xlu0 0
    %17 = vperm.xlu0 %16, %v13
    %v18 = vpop.permute.xlu0 %17
    %vm19 = vcmp.eq.s32.totalorder %v15, %v18
    %v20 = vand.u32 2147483647, %v12
    %v21 = vsub.f32 0.0, %v20
    %v22 = vmul.f32 %v21, 1.442695
    %v23 = vpow.pop %v22
    %v24 = vmax.f32 %v12, 0.0
    %v25 = vadd.f32 %v23, 1.0
    %v26 = vlog2.pop %v25
    %v27 = vmul.f32 %v26, 0.6931472
    %v28 = vmul.f32 -0.5, %v23
    %v29 = vadd.f32 %v28, 1.0
    %v30 = vmul.f32 %v29, %v23
    %v31 = vand.u32 2147483647, %v23
    %vm32 = vcmp.lt.f32.partialorder %v31, 0.0004427343
    %v33 = vsel %vm32, %v30, %v27
    %v34 = vadd.f32 %v24, %v33
    %v35 = vsub.f32 %v34, %v12
    %v36 = vmul.f32 %v35, 7.0
    %v37 = vsel %vm19, %v36, %v34
    %v38 = vadd.f32 %v23, 1.0
    %v39 = vrcp.pop %v38
    %vm40 = vcmp.ge.f32.partialorder %v12, 0.0
    %v41 = vmul.f32 %v23, %v39
    %v42 = vsel %vm40, %v39, %v41
    %v43 = vmul.f32 %v42, %v42
    %v44 = vmul.f32 %v43, %v43
    %v45 = vmul.f32 %v44, %v43
    %v46 = vmul.f32 %v45, %v42
    %v47 = vsub.f32 1.0, %v42
    %v48 = vsel %vm19, %v46, %v47
    %v49 = vsub.f32 1.0, %v48
    %v50 = vmul.f32 %v49, %v49
    %v51 = vmul.f32 %v50, %v37
    %vm52 = vcmask 285696
    %v53 = vsel %vm52, %v51, 0.0
    %v54 = vrot.slane %v53, 4
    %v55 = vadd.f32 %v53, %v54
    %v56 = vrot.slane %v55, 2
    %v57 = vadd.f32 %v55, %v56
    %v58 = vrot.slane %v57, 1
    %v59 = vadd.f32 %v57, %v58
    %vm60 = vcmask 278528
    %61 = vst.msk [vmem:[#allocation2] sm:$0x1] %vm60, %v59
    // Predicated region
    $region10: #{tpu_custom_call.1} parent=1 // pred_check
      _
    $region11: #{tpu_custom_call.1} parent=1 // pred_check_branch
      %63 = sbr.rel (0) target = $region13
    $region12: #{tpu_custom_call.1} parent=1 // pred_region
      %s65 = ssub.s32 16, 16
      %66 = vsyncadd [#allocation3], %s65
      %s68 = sshll.u32 [#allocation2], 4
      %s69 = int_to_ptr.vmem [resolvable:$true] %s68
      %71 = dma.vmem_to_hbm [thread:$0]  %s69, 16, %s2, [#allocation3]
    $region13: #{tpu_custom_call.1} parent=1 // pred_fallthru
      _
    // Predicated region
    $region14: #{tpu_custom_call.1} parent=1 // pred_check
      _
    $region15: #{tpu_custom_call.1} parent=1 // pred_check_branch
      %73 = sbr.rel (0) target = $region17
    $region16: #{tpu_custom_call.1} parent=1 // pred_region
      %74 = dma.done [#allocation3], 16
    $region17: #{tpu_custom_call.1} parent=1 // pred_fallthru
      _
    %75 = vsyncpa [#allocation3], 1

</llo_original>
